<compile_context>
chip_gen: v7x
topology: tpu7x:2x2x1
jax: 0.10.0
libtpu: 0.0.40
codegen_flags: <defaults>
</compile_context>

<pallas_src>
import functools

import jax
import jax.numpy as jnp
from jax.experimental import pallas as pl
from jax.experimental.pallas import tpu as pltpu


def _ngram_kernel(x_ref, o_ref, *, ngram, offset):
    """One grid step: x_ref (Bt, S, D) -> o_ref (Bt, S, ngram*D), single dense store."""
    Bt, S, D = x_ref.shape
    x = x_ref[...]                                   # single full-tile load
    dt = o_ref.dtype

    slots = []
    for i in range(ngram):                           # ngram is a compile-time constant
        s = offset - i                               # slot i reads x[:, t + s, :]
        if s == 0:
            slots.append(x)
        elif s >= S or -s >= S:                      # shift >= sequence: all zeros
            slots.append(jnp.zeros((Bt, S, D), dt))
        elif s > 0:
            # rows [0, S-s) <- x[s:], rows [S-s, S) are zero padding
            slots.append(jnp.concatenate(
                [x[:, s:, :], jnp.zeros((Bt, s, D), dt)], axis=1))
        else:
            m = -s
            # rows [0, m) are zero padding, rows [m, S) <- x[:S-m]
            slots.append(jnp.concatenate(
                [jnp.zeros((Bt, m, D), dt), x[:, : S - m, :]], axis=1))

    # One unmasked, full-lane-width store of the whole output tile (no per-slot
    # masked partial stores).  For packed sub-32-bit dtypes an XLU rotate
    # (pltpu.roll) + iota mask per slot is a drop-in alternative to the row
    # slice/concat used here; for f32 the slice/concat path is equivalent.
    o_ref[...] = jnp.concatenate(slots, axis=-1)


def _device_params():
    """Best-effort VMEM capacity and TensorCores-per-chip (safe fallbacks)."""
    vmem_cap = 64 << 20          # conservative default: v7x per-TC VMEM
    n_tc = 1
    try:
        info = pltpu.get_tpu_info()
        vmem_cap = int(getattr(info, "vmem_capacity_bytes", vmem_cap))
    except Exception:
        pass
    try:
        kind = jax.devices()[0].device_kind.lower()
        if "v7" in kind or "tpu7" in kind:
            n_tc = 2             # v7x: 2 TensorCores per chip
    except Exception:
        pass
    return vmem_cap, n_tc


def _pick_block_b(B, S, D, ngram, itemsize, *, vmem_cap, n_tc):
    """Batch-pack so each grid step moves a multi-MiB tile (amortizes the
    ~0.35 us per-step overhead, keeps HBM streaming efficient) while the
    double-buffered footprint stays well under the device's VMEM capacity."""
    per_b = S * D * (1 + ngram) * itemsize           # input + output bytes per batch row
    target = min(8 << 20, max(vmem_cap // 6, 1 << 20))
    bt = max(1, min(B, target // max(per_b, 1)))
    # Only 2-TC parts (v7x) benefit from >=2 grid steps (the "parallel" batch
    # axis is sharded across cores); on single-TC v5e/v6e the grid is a serial
    # loop, so keep the largest tile instead of splitting.
    if n_tc >= 2 and B >= 2:
        bt = min(bt, pl.cdiv(B, 2))
    return int(max(bt, 1))


def ngram_pallas(x, ngram, *, block_b=None):
    B, S, D = x.shape
    offset = (ngram - 1) // 2
    itemsize = x.dtype.itemsize

    vmem_cap, n_tc = _device_params()
    if block_b is None:
        block_b = _pick_block_b(B, S, D, ngram, itemsize,
                                vmem_cap=vmem_cap, n_tc=n_tc)

    # Pad awkward batch sizes up to a multiple of block_b (keeps tiles near the
    # target size for any B, e.g. prime B) and slice the result afterwards.
    n_steps = pl.cdiv(B, block_b)
    Bp = n_steps * block_b
    xp = x if Bp == B else jnp.pad(x, ((0, Bp - B), (0, 0), (0, 0)))

    # Per-step footprint: double-buffered input + output tiles.  Cap the VMEM
    # request against the real device capacity (v7x has only 64 MiB per TC).
    tile_bytes = block_b * S * D * (1 + ngram) * itemsize
    vmem_limit = int(min(int(vmem_cap * 0.9), max(32 << 20, 4 * tile_bytes)))
    # TODO(synk): for S*D so large that a single (S, D)+(S, ngram*D) batch row
    # exceeds the VMEM budget (earliest on v7x's 64 MiB), add sequence-axis
    # tiling with a haloed row window (manual make_async_copy of the shifted
    # contiguous rows); not needed at these shapes.

    kernel = functools.partial(_ngram_kernel, ngram=ngram, offset=offset)

    out = pl.pallas_call(
        kernel,
        out_shape=jax.ShapeDtypeStruct((Bp, S, ngram * D), x.dtype),
        grid=(n_steps,),
        in_specs=[pl.BlockSpec((block_b, S, D), lambda b: (b, 0, 0))],
        out_specs=pl.BlockSpec((block_b, S, ngram * D), lambda b: (b, 0, 0)),
        compiler_params=pltpu.CompilerParams(
            dimension_semantics=("parallel",),
            vmem_limit_bytes=vmem_limit,
        ),
        cost_estimate=pl.CostEstimate(
            flops=0,
            transcendentals=0,
            bytes_accessed=(1 + ngram) * Bp * S * D * itemsize,
        ),
    )(xp)
    return out if Bp == B else out[:B]


def ngram_reference(x, ngram):
    # Pure-JAX reference mirroring the PyTorch code path exactly.
    B, S, D = x.shape
    shifted = []
    for i in range(ngram):
        buf = jnp.zeros((B, S + ngram, D), dtype=x.dtype)
        buf = buf.at[:, i:i - ngram, :].set(x)
        shifted.append(buf)
    new_x = jnp.concatenate(shifted, axis=-1)
    offset = (ngram - 1) // 2
    return new_x[:, offset:offset - ngram, :]


if __name__ == "__main__":
    B, S, D = 2, 8, 32
    NGRAM = 3

    key = jax.random.PRNGKey(0)
    x = jax.random.normal(key, (B, S, D), dtype=jnp.float32)

    out = jax.block_until_ready(ngram_pallas(x, NGRAM))
    ref = ngram_reference(x, NGRAM)
    assert out.shape == (B, S, NGRAM * D)
    assert jnp.allclose(out, ref, atol=1e-6), "Pallas NGram mismatch vs reference"

    # Different ngram (wider shifts, >128-lane output width).
    out5 = jax.block_until_ready(ngram_pallas(x, 5))
    assert jnp.allclose(out5, ngram_reference(x, 5), atol=1e-6)

    # Awkward batch size (3 does not divide block_b=2): exercises the
    # pad-and-slice path for non-divisor batches.
    x3 = jax.random.normal(jax.random.PRNGKey(1), (3, S, D), dtype=jnp.float32)
    out3 = jax.block_until_ready(ngram_pallas(x3, NGRAM, block_b=2))
    assert jnp.allclose(out3, ngram_reference(x3, NGRAM), atol=1e-6)

    print("KERNEL_OK")
</pallas_src>

<mosaic_0001>
module attributes {stable_mosaic.version = 11 : i64} {
  func.func @_ngram_kernel(%arg0: i32, %arg1: memref<2x8x32xf32, #tpu.memory_space<vmem>>, %arg2: memref<2x8x96xf32, #tpu.memory_space<vmem>>) attributes {dimension_semantics = [#tpu.dimension_semantics<parallel>], iteration_bounds = array<i64: 1>, scalar_prefetch = 0 : i64, scratch_operands = 0 : i64, tpu.core_type = #tpu.core_type<tc>, window_params = [{transform_indices = @transform_0, window_bounds = array<i64: 2, 8, 32>}, {transform_indices = @transform_1, window_bounds = array<i64: 2, 8, 96>}]} {
    %c0 = arith.constant 0 : index
    %c0_0 = arith.constant 0 : index
    %c0_1 = arith.constant 0 : index
    %0 = vector.load %arg1[%c0, %c0_0, %c0_1] : memref<2x8x32xf32, #tpu.memory_space<vmem>>, vector<2x8x32xf32>
    %1 = vector.extract_strided_slice %0 {offsets = [0, 1, 0], sizes = [2, 7, 32], strides = [1, 1, 1]} : vector<2x8x32xf32> to vector<2x7x32xf32>
    %cst = arith.constant 0.000000e+00 : f32
    %2 = vector.broadcast %cst : f32 to vector<2x1x32xf32>
    %3 = tpu.concatenate %1, %2 in 1 : vector<2x7x32xf32>, vector<2x1x32xf32> -> vector<2x8x32xf32>
    %cst_2 = arith.constant 0.000000e+00 : f32
    %4 = vector.broadcast %cst_2 : f32 to vector<2x1x32xf32>
    %5 = vector.extract_strided_slice %0 {offsets = [0, 0, 0], sizes = [2, 7, 32], strides = [1, 1, 1]} : vector<2x8x32xf32> to vector<2x7x32xf32>
    %6 = tpu.concatenate %4, %5 in 1 : vector<2x1x32xf32>, vector<2x7x32xf32> -> vector<2x8x32xf32>
    %7 = tpu.concatenate %3, %0, %6 in 2 : vector<2x8x32xf32>, vector<2x8x32xf32>, vector<2x8x32xf32> -> vector<2x8x96xf32>
    %c0_3 = arith.constant 0 : index
    %c0_4 = arith.constant 0 : index
    %c0_5 = arith.constant 0 : index
    %8 = vector.load %arg2[%c0_3, %c0_4, %c0_5] : memref<2x8x96xf32, #tpu.memory_space<vmem>>, vector<2x8x96xf32>
    tpu.vector_store %arg2[%c0_3, %c0_4, %c0_5], %7 {strides = array<i32>} : memref<2x8x96xf32, #tpu.memory_space<vmem>>, vector<2x8x96xf32>,
    return
  }
  func.func @transform_0(%arg0: i32) -> (i32, i32, i32) {
    %c0_i32 = arith.constant 0 : i32
    %c0_i32_0 = arith.constant 0 : i32
    %c0_i32_1 = arith.constant 0 : i32
    return %arg0, %c0_i32, %c0_i32_0 : i32, i32, i32
  }
  func.func @transform_1(%arg0: i32) -> (i32, i32, i32) {
    %c0_i32 = arith.constant 0 : i32
    %c0_i32_0 = arith.constant 0 : i32
    %c0_i32_1 = arith.constant 0 : i32
    return %arg0, %c0_i32, %c0_i32_0 : i32, i32, i32
  }
}

</mosaic_0001>

<llo_original>
// kernel: tpu_custom_call.1
$region0: #{tpu_custom_call.1}
  #allocation0 [shape = 'u32[]', space=smem, size = 0x4, offset = 0x4, fixed_abs, tag = 'smem constant byte address 0x4 - core index']
  #allocation1 [shape = 'u32[144,128]{1,0:T(1,128)}', space=vmem, size = 0x12000, scoped, tag = 'internal scratch']
  %s0 = inlined_call_operand.hbm [shape: f32[2,8,32], index: 0, kind: input, shape index: {}]
  %s1 = inlined_call_operand.hbm [shape: f32[2,8,96], index: 1, kind: output, shape index: {}]
  %s2 = sld [smem:[#allocation0]]
  $region18: #{tpu_custom_call.1} parent=0
    _
  %s4 = ssub.s32 1, %s2
  %s5 = scalar_select 0, %s4, %s2
  $region1: #{tpu_custom_call.1} parent=0
    #allocation2 [shape = 'u8[8192]{0}', space=vmem, size = 0x2000, scoped, tag = 'input window, operand 0, single buffered']
    #allocation3 [shape = 's32[1]{0}', space=sflag, size = 0x4, scoped, tag = 'scoped memory for tpu_custom_call.1']
    #allocation4 [shape = 's32[1]{0}', space=sflag, size = 0x4, scoped, tag = 'scoped memory for tpu_custom_call.1']
    #allocation5 [shape = 'u8[8192]{0}', space=vmem, size = 0x2000, scoped, tag = 'output window, operand 0, single buffered']
    %6 = vsyncpa [#allocation3], 0
    %7 = vsyncpa [#allocation4], 0
    // Predicated region
    $region2: #{tpu_custom_call.1} parent=1 // pred_check
      _
    $region3: #{tpu_custom_call.1} parent=1 // pred_check_branch
      %9 = sbr.rel (0) target = $region5
    $region4: #{tpu_custom_call.1} parent=1 // pred_region
      %s11 = ssub.s32 256, 256
      %12 = vsyncadd [#allocation3], %s11
      %s13 = sshll.u32 [#allocation2], 4
      %s14 = int_to_ptr.vmem [resolvable:$true] %s13
      %19 = dma.hbm_to_vmem [thread:$0]  %s0, 256, %s14, [#allocation3], 128, 128, 8
    $region5: #{tpu_custom_call.1} parent=1 // pred_fallthru
      _
    // Predicated region
    $region6: #{tpu_custom_call.1} parent=1 // pred_check
      _
    $region7: #{tpu_custom_call.1} parent=1 // pred_check_branch
      %21 = sbr.rel (0) target = $region9
    $region8: #{tpu_custom_call.1} parent=1 // pred_region
      %22 = dma.done [#allocation3], 256
    $region9: #{tpu_custom_call.1} parent=1 // pred_fallthru
      _
    %v23 = vld [vmem:[#allocation2] sm:$0xff]
    %v24 = vld [vmem:[#allocation2 + $0x8] sm:$0xff]
    %v27 = vrot.slane %v23, 1
    %v28 = vrot.slane %v24, 1
    %vm31 = vcmask 1046528
    %v32 = vsel %vm31, %v27, 0.0
    %v33 = vsel %vm31, %v28, 0.0
    %v34 = vrot.slane %v23, 7
    %v35 = vrot.slane %v24, 7
    %vm38 = vcmask 1040384
    %v39 = vsel %vm38, 0.0, %v34
    %v40 = vsel %vm38, 0.0, %v35
    %41 = vrot.lane.b32.xlu0 %v23, 32
    %v42 = vpop.permute.xlu0 %41
    %43 = vrot.lane.b32.xlu0 %v24, 32
    %v44 = vpop.permute.xlu0 %43
    %49 = vrot.lane.b32.xlu0 %v39, 64
    %v50 = vpop.permute.xlu0 %49
    %51 = vrot.lane.b32.xlu0 %v40, 64
    %v52 = vpop.permute.xlu0 %51
    %vm55 = vcmask 261120
    %v56 = vsel %vm55, %v32, %v42
    %v57 = vsel %vm55, %v33, %v44
    %vm58 = vcmask 523264
    %v59 = vsel %vm58, %v56, %v50
    %v60 = vsel %vm58, %v57, %v52
    %vm61 = vcmask 785408
    %62 = vst.msk [vmem:[#allocation5] sm:$0xff] %vm61, %v59
    %63 = vst.msk [vmem:[#allocation5 + $0x8] sm:$0xff] %vm61, %v60
    // Predicated region
    $region10: #{tpu_custom_call.1} parent=1 // pred_check
      _
    $region11: #{tpu_custom_call.1} parent=1 // pred_check_branch
      %65 = sbr.rel (0) target = $region13
    $region12: #{tpu_custom_call.1} parent=1 // pred_region
      %s67 = ssub.s32 256, 256
      %68 = vsyncadd [#allocation4], %s67
      %s69 = sshll.u32 [#allocation5], 4
      %s70 = int_to_ptr.vmem [resolvable:$true] %s69
      %75 = dma.vmem_to_hbm [thread:$0]  %s70, 256, %s1, [#allocation4], 128, 128, 8
    $region13: #{tpu_custom_call.1} parent=1 // pred_fallthru
      _
    // Predicated region
    $region14: #{tpu_custom_call.1} parent=1 // pred_check
      _
    $region15: #{tpu_custom_call.1} parent=1 // pred_check_branch
      %77 = sbr.rel (0) target = $region17
    $region16: #{tpu_custom_call.1} parent=1 // pred_region
      %78 = dma.done [#allocation4], 256
    $region17: #{tpu_custom_call.1} parent=1 // pred_fallthru
      _
    %79 = vsyncpa [#allocation3], 1
    %80 = vsyncpa [#allocation4], 1

</llo_original>
